<compile_context>
chip_gen: v7x
topology: tpu7x:2x2x1
jax: 0.10.0
libtpu: 0.0.40
codegen_flags: <defaults>
</compile_context>

<pallas_src>
import functools
import math

import jax
import jax.numpy as jnp
from jax import lax
from jax.experimental import pallas as pl
from jax.experimental.pallas import tpu as pltpu

SMOOTH = 0.1
CLIP_VALUE = 1e-07


def _rce_kernel(logits_ref, targets_ref, out_ref, *, n_total, block_rows,
                log_on, log_off):
    # logits_ref: (TN, C) in input dtype; targets_ref: (TN, 1) int32.
    logits = logits_ref[...].astype(jnp.float32)
    tn, c = logits.shape
    tgt = targets_ref[...]                                        # (TN, 1)

    # Target-class logit via select+reduce on the raw logits tile.  This is
    # VPU/XLU work that is independent of the full-tile exp below, so it
    # overlaps the EUP stream instead of waiting on it.
    cls_idx = lax.broadcasted_iota(jnp.int32, (tn, c), 1)
    logit_t = jnp.sum(jnp.where(cls_idx == tgt, logits, 0.0),
                      axis=1, keepdims=True)                      # (TN, 1)

    # Numerically stable softmax denominator over the class (lane) axis.
    m = jnp.max(logits, axis=1, keepdims=True)                    # (TN, 1)
    sum_e = jnp.sum(jnp.exp(logits - m), axis=1, keepdims=True)   # (TN, 1)
    p_t = jnp.exp(logit_t - m) / sum_e                            # (TN, 1)

    # Mask padded rows of a ragged last tile with a per-row select so that
    # Inf/NaN from undefined padded data cannot leak into valid rows.
    row_ids = (pl.program_id(0) * block_rows
               + lax.broadcasted_iota(jnp.int32, (tn, 1), 0))
    p_t = jnp.where(row_ids < n_total, p_t, 0.0)

    n_valid = jnp.minimum(
        jnp.int32(block_rows),
        jnp.int32(n_total) - pl.program_id(0) * block_rows).astype(jnp.float32)

    # Folded epilogue:
    #   sum_rows -(p_t*log_on + (1-p_t)*log_off)
    # = -((log_on - log_off) * sum(p_t) + log_off * n_valid)
    partial = -((log_on - log_off) * jnp.sum(p_t) + log_off * n_valid)

    # Lane-dense (unmasked) store of this tile's partial sum.
    out_ref[...] = jnp.full((1, 1, 128), partial, dtype=jnp.float32)


def rce_loss(logits, targets, *, smooth=SMOOTH, clip_value=CLIP_VALUE,
             block_rows=None):
    """logits: (N, C) float (any dtype); targets: (N,) int. Returns scalar f32."""
    n, c = logits.shape
    if c < 2:
        # Same divide-by-zero as the torch module (smooth / (C - 1)); guard it.
        raise ValueError("RCE requires num_classes >= 2.")
    targets2d = targets.reshape(n, 1).astype(jnp.int32)

    # Trace-time constants (same clamp semantics as the torch module).
    on_val = min(max(1.0 - smooth, clip_value), 1.0 - clip_value)
    off_val = min(max(smooth / (c - 1), clip_value), 1.0 - clip_value)
    log_on = math.log(on_val)
    log_off = math.log(off_val)

    in_itemsize = jnp.dtype(logits.dtype).itemsize
    if block_rows is None:
        # VMEM accounting in f32 terms: 2x double-buffered input tile plus
        # ~4 tile-sized f32 temporaries (f32 cast, exp, iota/select, slack).
        # Target ~24 MiB of live VMEM so everything stays inside the explicit
        # 48 MiB limit below with headroom for pipeline buffers.
        per_row_bytes = 2 * c * in_itemsize + 4 * c * 4 + 64
        budget_bytes = 24 * 1024 * 1024
        block_rows = max(8, budget_bytes // per_row_bytes)
    # Guarantee >= 2 grid steps whenever possible (megacore on v7x, pipeline
    # overlap everywhere) instead of collapsing into a single giant tile.
    if n >= 16:
        half = -(-n // 2)
        half = -(-half // 8) * 8            # round half up to a multiple of 8
        block_rows = min(block_rows, half)
    block_rows = int(block_rows)
    if block_rows >= n:
        block_rows = n                      # single tile: block == full array
    else:
        block_rows = max(8, (block_rows // 8) * 8)
    num_tiles = pl.cdiv(n, block_rows)

    kernel = functools.partial(
        _rce_kernel, n_total=n, block_rows=block_rows,
        log_on=log_on, log_off=log_off)

    partials = pl.pallas_call(
        kernel,
        out_shape=jax.ShapeDtypeStruct((num_tiles, 1, 128), jnp.float32),
        grid=(num_tiles,),
        in_specs=[
            pl.BlockSpec((block_rows, c), lambda i: (i, 0)),
            pl.BlockSpec((block_rows, 1), lambda i: (i, 0)),
        ],
        out_specs=pl.BlockSpec((1, 1, 128), lambda i: (i, 0, 0)),
        compiler_params=pltpu.CompilerParams(
            dimension_semantics=("parallel",),
            vmem_limit_bytes=48 * 1024 * 1024),
    )(logits, targets2d)

    # Tiny final reduction in plain JAX; divide by the true N.
    return jnp.sum(partials[:, 0, 0]) / jnp.float32(n)


def _rce_ref(logits, targets, smooth=SMOOTH, clip_value=CLIP_VALUE):
    n, c = logits.shape
    probs = jax.nn.softmax(logits.astype(jnp.float32), axis=1)
    smooth_t = jnp.full((n, c), smooth / (c - 1), dtype=jnp.float32)
    smooth_t = smooth_t.at[jnp.arange(n), targets].set(1.0 - smooth)
    smooth_t = jnp.clip(smooth_t, clip_value, 1.0 - clip_value)
    return jnp.mean(-jnp.sum(probs * jnp.log(smooth_t), axis=1))


if __name__ == "__main__":
    key = jax.random.PRNGKey(0)
    k1, k2, k3, k4, k5, k6 = jax.random.split(key, 6)

    # Case 1: single-tile path (matches the module's toy shapes).
    N, C = 8, 32
    logits = jax.random.normal(k1, (N, C), dtype=jnp.float32)
    targets = jax.random.randint(k2, (N,), 0, C, dtype=jnp.int32)
    loss = rce_loss(logits, targets)
    jax.block_until_ready(loss)
    ref = _rce_ref(logits, targets)
    assert jnp.allclose(loss, ref, rtol=1e-5, atol=1e-5), (loss, ref)

    # Case 2: explicit small tile -> multi-tile grid with a ragged last tile
    # (exercises the per-row masking).
    N2, C2 = 20, 160
    logits2 = jax.random.normal(k3, (N2, C2), dtype=jnp.float32)
    targets2 = jax.random.randint(k4, (N2,), 0, C2, dtype=jnp.int32)
    loss2 = rce_loss(logits2, targets2, block_rows=8)
    jax.block_until_ready(loss2)
    ref2 = _rce_ref(logits2, targets2)
    assert jnp.allclose(loss2, ref2, rtol=1e-5, atol=1e-5), (loss2, ref2)

    # Case 3: default heuristic path, N >= 16 -> forced >= 2 tiles; bf16
    # logits stream in their original dtype and are cast in-kernel.
    N3, C3 = 64, 128
    logits3 = jax.random.normal(k5, (N3, C3), dtype=jnp.float32).astype(jnp.bfloat16)
    targets3 = jax.random.randint(k6, (N3,), 0, C3, dtype=jnp.int32)
    loss3 = rce_loss(logits3, targets3)
    jax.block_until_ready(loss3)
    ref3 = _rce_ref(logits3.astype(jnp.float32), targets3)
    assert jnp.allclose(loss3, ref3, rtol=1e-2, atol=1e-2), (loss3, ref3)

    print("KERNEL_OK")
</pallas_src>

<mosaic_0001>
module attributes {stable_mosaic.version = 11 : i64} {
  func.func @_rce_kernel(%arg0: i32, %arg1: memref<8x32xf32, #tpu.memory_space<vmem>>, %arg2: memref<8x1xi32, #tpu.memory_space<vmem>>, %arg3: memref<1x1x128xf32, #tpu.memory_space<vmem>>) attributes {dimension_semantics = [#tpu.dimension_semantics<parallel>], iteration_bounds = array<i64: 1>, scalar_prefetch = 0 : i64, scratch_operands = 0 : i64, tpu.core_type = #tpu.core_type<tc>, window_params = [{transform_indices = @transform_0, window_bounds = array<i64: 8, 32>}, {transform_indices = @transform_1, window_bounds = array<i64: 8, 1>}, {transform_indices = @transform_2, window_bounds = array<i64: 1, 1, 128>}]} {
    %c0 = arith.constant 0 : index
    %c0_0 = arith.constant 0 : index
    %0 = vector.load %arg1[%c0, %c0_0] : memref<8x32xf32, #tpu.memory_space<vmem>>, vector<8x32xf32>
    %c0_1 = arith.constant 0 : index
    %c0_2 = arith.constant 0 : index
    %1 = vector.load %arg2[%c0_1, %c0_2] : memref<8x1xi32, #tpu.memory_space<vmem>>, vector<8x1xi32>
    %2 = tpu.iota {dimensions = array<i32: 1>} : vector<8x32xi32>
    %3 = vector.broadcast %1 : vector<8x1xi32> to vector<8x32xi32>
    %4 = arith.cmpi eq, %2, %3 : vector<8x32xi32>
    %cst = arith.constant 0.000000e+00 : f32
    %5 = vector.broadcast %cst : f32 to vector<8x32xf32>
    %6 = arith.select %4, %0, %5 : vector<8x32xi1>, vector<8x32xf32>
    %cst_3 = arith.constant dense<0.000000e+00> : vector<8xf32>
    %7 = vector.multi_reduction <add>, %6, %cst_3 [1] : vector<8x32xf32> to vector<8xf32>
    %8 = vector.shape_cast %7 : vector<8xf32> to vector<8x1xf32>
    %cst_4 = arith.constant dense<0xFF800000> : vector<8xf32>
    %9 = vector.multi_reduction <maximumf>, %0, %cst_4 [1] : vector<8x32xf32> to vector<8xf32>
    %10 = vector.shape_cast %9 : vector<8xf32> to vector<8x1xf32>
    %11 = vector.broadcast %10 : vector<8x1xf32> to vector<8x32xf32>
    %12 = arith.subf %0, %11 : vector<8x32xf32>
    %13 = math.exp %12 : vector<8x32xf32>
    %cst_5 = arith.constant dense<0.000000e+00> : vector<8xf32>
    %14 = vector.multi_reduction <add>, %13, %cst_5 [1] : vector<8x32xf32> to vector<8xf32>
    %15 = vector.shape_cast %14 : vector<8xf32> to vector<8x1xf32>
    %16 = arith.subf %8, %10 : vector<8x1xf32>
    %17 = math.exp %16 : vector<8x1xf32>
    %18 = arith.divf %17, %15 : vector<8x1xf32>
    %c8_i32 = arith.constant 8 : i32
    %19 = arith.muli %arg0, %c8_i32 : i32
    %20 = tpu.iota {dimensions = array<i32: 0>} : vector<8x1xi32>
    %21 = vector.broadcast %19 : i32 to vector<8x1xi32>
    %22 = arith.addi %21, %20 : vector<8x1xi32>
    %c8_i32_6 = arith.constant 8 : i32
    %23 = vector.broadcast %c8_i32_6 : i32 to vector<8x1xi32>
    %24 = arith.cmpi slt, %22, %23 : vector<8x1xi32>
    %cst_7 = arith.constant 0.000000e+00 : f32
    %25 = vector.broadcast %cst_7 : f32 to vector<8x1xf32>
    %26 = arith.select %24, %18, %25 : vector<8x1xi1>, vector<8x1xf32>
    %c8_i32_8 = arith.constant 8 : i32
    %27 = arith.muli %arg0, %c8_i32_8 : i32
    %c8_i32_9 = arith.constant 8 : i32
    %28 = arith.subi %c8_i32_9, %27 : i32
    %c8_i32_10 = arith.constant 8 : i32
    %29 = arith.minsi %c8_i32_10, %28 : i32
    %30 = arith.sitofp %29 : i32 to f32
    %31 = vector.shape_cast %26 : vector<8x1xf32> to vector<1x8x1xf32>
    %cst_11 = arith.constant dense<0.000000e+00> : vector<1xf32>
    %32 = vector.multi_reduction <add>, %31, %cst_11 [1, 2] : vector<1x8x1xf32> to vector<1xf32>
    %33 = vector.shape_cast %32 : vector<1xf32> to vector<1x1x1xf32>
    %34 = vector.extract %33[0, 0, 0] : f32 from vector<1x1x1xf32>
    %cst_12 = arith.constant 5.63121176 : f32
    %35 = arith.mulf %cst_12, %34 : f32
    %cst_13 = arith.constant -5.73657227 : f32
    %36 = arith.mulf %cst_13, %30 : f32
    %37 = arith.addf %35, %36 : f32
    %cst_14 = arith.constant 0.000000e+00 : f32
    %38 = arith.subf %cst_14, %37 : f32
    %39 = vector.broadcast %38 : f32 to vector<1x1x128xf32>
    %c0_15 = arith.constant 0 : index
    %c0_16 = arith.constant 0 : index
    %c0_17 = arith.constant 0 : index
    %40 = vector.load %arg3[%c0_15, %c0_16, %c0_17] : memref<1x1x128xf32, #tpu.memory_space<vmem>>, vector<1x1x128xf32>
    tpu.vector_store %arg3[%c0_15, %c0_16, %c0_17], %39 {strides = array<i32>} : memref<1x1x128xf32, #tpu.memory_space<vmem>>, vector<1x1x128xf32>,
    return
  }
  func.func @transform_0(%arg0: i32) -> (i32, i32) {
    %c0_i32 = arith.constant 0 : i32
    %c0_i32_0 = arith.constant 0 : i32
    return %arg0, %c0_i32 : i32, i32
  }
  func.func @transform_1(%arg0: i32) -> (i32, i32) {
    %c0_i32 = arith.constant 0 : i32
    %c0_i32_0 = arith.constant 0 : i32
    return %arg0, %c0_i32 : i32, i32
  }
  func.func @transform_2(%arg0: i32) -> (i32, i32, i32) {
    %c0_i32 = arith.constant 0 : i32
    %c0_i32_0 = arith.constant 0 : i32
    %c0_i32_1 = arith.constant 0 : i32
    return %arg0, %c0_i32, %c0_i32_0 : i32, i32, i32
  }
}

</mosaic_0001>

<llo_original>
// kernel: tpu_custom_call.1
$region0: #{tpu_custom_call.1}
  #allocation0 [shape = 'u32[]', space=smem, size = 0x4, offset = 0x4, fixed_abs, tag = 'smem constant byte address 0x4 - core index']
  #allocation1 [shape = 'u32[144,128]{1,0:T(1,128)}', space=vmem, size = 0x12000, scoped, tag = 'internal scratch']
  %s0 = inlined_call_operand.vmem [shape: f32[8,32], index: 0, kind: input, shape index: {}]
  %s1 = inlined_call_operand.vmem [shape: s32[8,1], index: 1, kind: input, shape index: {}]
  %s2 = inlined_call_operand.hbm [shape: f32[1,1,128], index: 2, kind: output, shape index: {}]
  %s3 = sld [smem:[#allocation0]]
  $region18: #{tpu_custom_call.1} parent=0
    _
  %s5 = ssub.s32 1, %s3
  %s6 = scalar_select 0, %s5, %s3
  $region1: #{tpu_custom_call.1} parent=0
    #allocation2 [shape = 'u8[512]{0}', space=vmem, size = 0x400, scoped, tag = 'output window, operand 0, single buffered']
    #allocation3 [shape = 's32[1]{0}', space=sflag, size = 0x4, scoped, tag = 'scoped memory for tpu_custom_call.1']
    %7 = vsyncpa [#allocation3], 0
    // Predicated region
    $region2: #{tpu_custom_call.1} parent=1 // pred_check
      _
    $region3: #{tpu_custom_call.1} parent=1 // pred_check_branch
      %9 = sbr.rel (0) target = $region5
    $region4: #{tpu_custom_call.1} parent=1 // pred_region
      _
    $region5: #{tpu_custom_call.1} parent=1 // pred_fallthru
      _
    // Predicated region
    $region6: #{tpu_custom_call.1} parent=1 // pred_check
      _
    $region7: #{tpu_custom_call.1} parent=1 // pred_check_branch
      %11 = sbr.rel (0) target = $region9
    $region8: #{tpu_custom_call.1} parent=1 // pred_region
      _
    $region9: #{tpu_custom_call.1} parent=1 // pred_fallthru
      _
    %v12 = vld [vmem:[%s0] sm:$0xff]
    %v13 = vld [vmem:[%s1] sm:$0xff]
    %v14 = vlaneseq
    %v15 = vand.u32 %v14, 127
    %16 = vset.pattern.permute.xlu0 0
    %17 = vperm.xlu0 %16, %v13
    %v18 = vpop.permute.xlu0 %17
    %vm19 = vcmp.eq.s32.totalorder %v15, %v18
    %v20 = vsel %vm19, %v12, 0.0
    %vm21 = vcmask 261120
    %v22 = vsel %vm21, %v20, 0.0
    %23 = vadd.xlane.f32.xlu0 %v22
    %v24 = vpop.xlane.xlu0 %23
    %v25 = vsel %vm21, %v12, -inf
    %26 = vmax.xlane.f32.xlu0 %v25
    %v27 = vpop.xlane.xlu0 %26
    %v28 = vsub.f32 %v12, %v27
    %v29 = vmul.f32 %v28, 1.442695
    %v30 = vpow.pop %v29
    %v31 = vsel %vm21, %v30, 0.0
    %32 = vadd.xlane.f32.xlu0 %v31
    %v33 = vpop.xlane.xlu0 %32
    %v34 = vsub.f32 %v24, %v27
    %v35 = vmul.f32 %v34, 1.442695
    %v36 = vpow.pop %v35
    %v37 = vrcp.pop %v33
    %v38 = vmul.f32 %v36, %v37
    %s39 = smul.u32 0, 8
    %v40 = vlaneseq
    %v41 = vshrl.u32 %v40, 7
    %v42 = vstv %s39
    %v43 = vadd.s32 %v42, %v41
    %vm44 = vcmp.lt.s32.totalorder %v43, 8
    %v45 = vsel %vm44, %v38, 0.0
    %s46 = ssub.s32 8, %s39
    %p47 = scmp.lt.s32.totalorder %s46, 8
    %s48 = scalar_select %p47, %s46, 8
    %s49 = scvt.s32.f32 %s48
    %vm50 = vcmask 7168
    %v51 = vsel %vm50, %v45, 0.0
    %52 = vadd.xlane.f32.xlu0 %v51
    %v53 = vpop.xlane.xlu0 %52
    %v54 = vrot.slane %v53, 4
    %v55 = vadd.f32 %v53, %v54
    %v56 = vrot.slane %v55, 2
    %v57 = vadd.f32 %v55, %v56
    %v58 = vrot.slane %v57, 1
    %v59 = vadd.f32 %v57, %v58
    %s60 = vtos %v59
    %s61 = smul.f32 %s60, 5.6312118
    %s62 = smul.f32 %s49, -5.7365723
    %s63 = sadd.f32 %s61, %s62
    %s64 = ssub.f32 0.0, %s63
    %v65 = vstv %s64
    %66 = vst [vmem:[#allocation2] sm:$0x1] %v65
    // Predicated region
    $region10: #{tpu_custom_call.1} parent=1 // pred_check
      _
    $region11: #{tpu_custom_call.1} parent=1 // pred_check_branch
      %68 = sbr.rel (0) target = $region13
    $region12: #{tpu_custom_call.1} parent=1 // pred_region
      %s70 = ssub.s32 16, 16
      %71 = vsyncadd [#allocation3], %s70
      %s73 = sshll.u32 [#allocation2], 4
      %s74 = int_to_ptr.vmem [resolvable:$true] %s73
      %76 = dma.vmem_to_hbm [thread:$0]  %s74, 16, %s2, [#allocation3]
    $region13: #{tpu_custom_call.1} parent=1 // pred_fallthru
      _
    // Predicated region
    $region14: #{tpu_custom_call.1} parent=1 // pred_check
      _
    $region15: #{tpu_custom_call.1} parent=1 // pred_check_branch
      %78 = sbr.rel (0) target = $region17
    $region16: #{tpu_custom_call.1} parent=1 // pred_region
      %79 = dma.done [#allocation3], 16
    $region17: #{tpu_custom_call.1} parent=1 // pred_fallthru
      _
    %80 = vsyncpa [#allocation3], 1

</llo_original>
